<compile_context>
chip_gen: v7x
topology: tpu7x:2x2x1
jax: 0.10.0
libtpu: 0.0.40
codegen_flags: <defaults>
</compile_context>

<pallas_src>
import math

import jax
import jax.numpy as jnp
from jax.experimental import pallas as pl
from jax.experimental.pallas import tpu as pltpu


def _leaky_relu(x, slope=0.2):
    return jnp.where(x > 0, x, slope * x)


def _mlp_kernel(x_ref, w1_ref, b1_ref, w2_ref, b2_ref, w3_ref, b3_ref, o_ref):
    """One batch tile; transposed layout (features on sublanes, batch on lanes).

    x_ref  : (d_in, TILE_B) bf16
    w1_ref : (d_h2, d_in)   bf16    b1_ref : (d_h2, 1) f32
    w2_ref : (d_h,  d_h2)   bf16    b2_ref : (d_h, 1)  f32
    w3_ref : (d_h,  1)      f32     b3_ref : (1, 1)    f32 (SMEM scalar)
    o_ref  : (1, TILE_B)    f32     (lane-dense output)
    """
    x = x_ref[...]

    # Layer 1: MXU matmul, bf16 inputs, f32 accumulate.
    h1 = jnp.dot(w1_ref[...], x, preferred_element_type=jnp.float32)
    h1 = _leaky_relu(h1 + b1_ref[...])

    # Layer 2: MXU matmul (cast activation back to bf16 for the MXU).
    h2 = jnp.dot(w2_ref[...], h1.astype(w2_ref.dtype),
                 preferred_element_type=jnp.float32)
    h2 = _leaky_relu(h2 + b2_ref[...])

    # Layer 3: out_features == 1 -> sublane reduce (VPU/XLU) instead of a
    # degenerate MXU matmul; result is directly lane-dense (1, TILE_B).
    z = jnp.sum(h2 * w3_ref[...], axis=0, keepdims=True) + b3_ref[0, 0]
    o_ref[...] = jax.nn.sigmoid(z)


def _round_up(v, m):
    return -(-v // m) * m


def _pick_tile_b(batch, requested):
    """Lane-multiple batch tile.

    Shrinks the requested tile for small batches (don't burn MXU passes on
    padding) and prefers >= 2 grid steps so the "parallel" batch axis can be
    sharded across both v7x TensorCores.
    """
    tile = max(128, min(_round_up(requested, 128), _round_up(batch, 128)))
    while tile > 128 and batch > 128 and pl.cdiv(batch, tile) < 2:
        tile = max(128, _round_up(tile // 2, 128))
    return tile


def _vmem_tile_bytes(shape, dtype):
    """Conservative padded VMEM footprint of a single buffer of `shape`."""
    itemsize = jnp.dtype(dtype).itemsize
    sublane = 8 * max(1, 4 // itemsize)          # (8,128) f32 tile, (16,128) bf16
    r, c = shape[-2], shape[-1]
    lead = 1
    for d in shape[:-2]:
        lead *= d
    return lead * _round_up(r, sublane) * _round_up(c, 128) * itemsize


def prepare_params(params):
    """One-time weight preprocessing (hoisted out of the per-call path)."""
    w1, b1, w2, b2, w3, b3 = params               # PyTorch layout: W is (out, in)
    return {
        "w1": jnp.asarray(w1, jnp.bfloat16),                # (d_h2, d_in)
        "b1": jnp.asarray(b1, jnp.float32).reshape(-1, 1),  # (d_h2, 1)
        "w2": jnp.asarray(w2, jnp.bfloat16),                # (d_h, d_h2)
        "b2": jnp.asarray(b2, jnp.float32).reshape(-1, 1),  # (d_h, 1)
        "w3": jnp.asarray(w3, jnp.float32).reshape(-1, 1),  # (d_h, 1) stays f32
        "b3": jnp.asarray(b3, jnp.float32).reshape(1, 1),   # (1, 1) SMEM scalar
    }


def discriminator_corr_forward(x, prepared, *, tile_b=512):
    """x: (B, seq_length, n_assets) float32. Returns (B, 1) float32."""
    B = x.shape[0]
    x_flat = x.reshape(B, -1)                     # matches nn.Flatten
    d_in = x_flat.shape[1]

    w1, b1 = prepared["w1"], prepared["b1"]
    w2, b2 = prepared["w2"], prepared["b2"]
    w3, b3 = prepared["w3"], prepared["b3"]
    d_h2, d_h = w1.shape[0], w2.shape[0]
    assert w1.shape[1] == d_in

    tile_b = _pick_tile_b(B, tile_b)
    num_tiles = pl.cdiv(B, tile_b)

    # Transposed bf16 activations, NO explicit zero-padding: Pallas handles
    # the ragged final batch block; padded lanes never contaminate valid
    # columns (every op is column-independent) and we slice [:B] below.
    x_t = x_flat.astype(jnp.bfloat16).T           # (d_in, B)

    # Explicit scoped-VMEM budget: single-buffered resident weights/biases
    # plus double-buffered activation/output tiles, +30% headroom.
    vmem_need = (
        _vmem_tile_bytes((d_h2, d_in), jnp.bfloat16)
        + _vmem_tile_bytes((d_h, d_h2), jnp.bfloat16)
        + _vmem_tile_bytes((d_h2, 1), jnp.float32)
        + 2 * _vmem_tile_bytes((d_h, 1), jnp.float32)
        + 2 * _vmem_tile_bytes((d_in, tile_b), jnp.bfloat16)
        + 2 * _vmem_tile_bytes((1, tile_b), jnp.float32)
    )
    vmem_limit = int(min(max(int(vmem_need * 1.3) + (2 << 20), 16 << 20), 64 << 20))

    flops = 2 * num_tiles * tile_b * (d_in * d_h2 + d_h2 * d_h + d_h)
    bytes_accessed = (
        x_t.size * 2 + w1.size * 2 + w2.size * 2
        + (b1.size + b2.size + w3.size + b3.size) * 4
        + B * 4
    )

    def resident_spec(shape, mode):
        # Constant index_map -> block is resident across all grid steps.
        if mode is None:
            return pl.BlockSpec(shape, lambda i: (0, 0))
        return pl.BlockSpec(shape, lambda i: (0, 0), pipeline_mode=mode)

    def call(resident_mode):
        return pl.pallas_call(
            _mlp_kernel,
            out_shape=jax.ShapeDtypeStruct((1, B), jnp.float32),
            grid=(num_tiles,),
            in_specs=[
                # Activation tile: pipelined / double-buffered over the batch grid.
                pl.BlockSpec((d_in, tile_b), lambda i: (0, i)),
                # Weights & biases: resident; single-buffered when supported.
                resident_spec((d_h2, d_in), resident_mode),
                resident_spec((d_h2, 1), resident_mode),
                resident_spec((d_h, d_h2), resident_mode),
                resident_spec((d_h, 1), resident_mode),
                resident_spec((d_h, 1), resident_mode),
                # Final-layer bias: a single scalar, keep it in SMEM.
                pl.BlockSpec(memory_space=pltpu.MemorySpace.SMEM),
            ],
            out_specs=pl.BlockSpec((1, tile_b), lambda i: (0, i)),   # lane-dense
            compiler_params=pltpu.CompilerParams(
                dimension_semantics=("parallel",),
                vmem_limit_bytes=vmem_limit),
            cost_estimate=pl.CostEstimate(
                flops=flops,
                transcendentals=num_tiles * tile_b,
                bytes_accessed=bytes_accessed),
        )(x_t, w1, b1, w2, b2, w3, b3)

    try:
        out = call(pl.Buffered(1))
    except Exception:
        # Fallback if this jax/backend rejects single-buffered resident blocks:
        # default double-buffering (costs one extra VMEM copy of W1/W2 only).
        out = call(None)

    # Restore (B, 1) like the PyTorch module.
    return out.reshape(B, 1)


def init_params(key, n_assets, seq_length, hidden_dim):
    """torch.nn.Linear-style init, PyTorch weight layout (out_features, in_features)."""
    d_in = n_assets * seq_length
    d_h2 = hidden_dim * 2
    d_h = hidden_dim

    keys = jax.random.split(key, 6)

    def linear(kw, kb, fan_in, fan_out):
        bound = 1.0 / math.sqrt(fan_in)
        w = jax.random.uniform(kw, (fan_out, fan_in), jnp.float32, -bound, bound)
        b = jax.random.uniform(kb, (fan_out, 1), jnp.float32, -bound, bound)
        return w, b

    w1, b1 = linear(keys[0], keys[1], d_in, d_h2)
    w2, b2 = linear(keys[2], keys[3], d_h2, d_h)
    w3, b3 = linear(keys[4], keys[5], d_h, 1)
    return (w1, b1, w2, b2, w3, b3)


def reference_forward(x, params):
    """Pure-JAX f32 reference of the same math (PyTorch semantics)."""
    w1, b1, w2, b2, w3, b3 = params
    h = x.reshape(x.shape[0], -1)
    h = _leaky_relu(h @ w1.T + b1[:, 0])
    h = _leaky_relu(h @ w2.T + b2[:, 0])
    return jax.nn.sigmoid(h @ w3.T + b3[:, 0])


if __name__ == "__main__":
    # Small shapes consistent with the module: batch=2, seq=8, assets=4, hidden=32.
    batch = 2
    seq_length = 8
    n_assets = 4
    hidden_dim = 32

    key = jax.random.PRNGKey(0)
    k_x, k_p = jax.random.split(key)

    x = jax.random.normal(k_x, (batch, seq_length, n_assets), dtype=jnp.float32)
    params = init_params(k_p, n_assets, seq_length, hidden_dim)

    prepared = prepare_params(params)        # one-time weight cast/reshape (hoisted)

    out = discriminator_corr_forward(x, prepared)
    out = jax.block_until_ready(out)

    ref = reference_forward(x, params)
    assert out.shape == (batch, 1)
    # bf16 MXU inputs -> widened tolerance vs the f32 reference.
    assert jnp.allclose(out, ref, atol=2e-2, rtol=2e-2)

    print("KERNEL_OK")
</pallas_src>

<mosaic_0001>
module attributes {stable_mosaic.version = 11 : i64} {
  func.func @_mlp_kernel(%arg0: i32, %arg1: memref<32x128xbf16, #tpu.memory_space<vmem>>, %arg2: memref<64x32xbf16, #tpu.memory_space<vmem>>, %arg3: memref<64x1xf32, #tpu.memory_space<vmem>>, %arg4: memref<32x64xbf16, #tpu.memory_space<vmem>>, %arg5: memref<32x1xf32, #tpu.memory_space<vmem>>, %arg6: memref<32x1xf32, #tpu.memory_space<vmem>>, %arg7: memref<1x1xf32, #tpu.memory_space<smem>>, %arg8: memref<1x128xf32, #tpu.memory_space<vmem>>) attributes {dimension_semantics = [#tpu.dimension_semantics<parallel>], iteration_bounds = array<i64: 1>, scalar_prefetch = 0 : i64, scratch_operands = 0 : i64, tpu.core_type = #tpu.core_type<tc>, window_params = [{transform_indices = @transform_0, window_bounds = array<i64: 32, 128>}, {pipeline_mode = #tpu.pipeline_mode<synchronous>, transform_indices = @transform_1, window_bounds = array<i64: 64, 32>}, {pipeline_mode = #tpu.pipeline_mode<synchronous>, transform_indices = @transform_2, window_bounds = array<i64: 64, 1>}, {pipeline_mode = #tpu.pipeline_mode<synchronous>, transform_indices = @transform_3, window_bounds = array<i64: 32, 64>}, {pipeline_mode = #tpu.pipeline_mode<synchronous>, transform_indices = @transform_4, window_bounds = array<i64: 32, 1>}, {pipeline_mode = #tpu.pipeline_mode<synchronous>, transform_indices = @transform_5, window_bounds = array<i64: 32, 1>}, {transform_indices = @transform_6, window_bounds = array<i64: 1, 1>}, {transform_indices = @transform_7, window_bounds = array<i64: 1, 128>}]} {
    %c0 = arith.constant 0 : index
    %c0_0 = arith.constant 0 : index
    %0 = vector.load %arg1[%c0, %c0_0] : memref<32x128xbf16, #tpu.memory_space<vmem>>, vector<32x128xbf16>
    %c0_1 = arith.constant 0 : index
    %c0_2 = arith.constant 0 : index
    %1 = vector.load %arg2[%c0_1, %c0_2] : memref<64x32xbf16, #tpu.memory_space<vmem>>, vector<64x32xbf16>
    %cst = arith.constant dense<0.000000e+00> : vector<64x128xf32>
    %2 = tpu.matmul %1, %0, %cst {dimension_numbers = #tpu.dot_dimension_numbers<[1], [0], [0], [1], [0, 0, 1, 1], [], []>} : vector<64x32xbf16>, vector<32x128xbf16>, vector<64x128xf32> -> vector<64x128xf32>
    %c0_3 = arith.constant 0 : index
    %c0_4 = arith.constant 0 : index
    %3 = vector.load %arg3[%c0_3, %c0_4] : memref<64x1xf32, #tpu.memory_space<vmem>>, vector<64x1xf32>
    %4 = vector.broadcast %3 : vector<64x1xf32> to vector<64x128xf32>
    %5 = arith.addf %2, %4 : vector<64x128xf32>
    %cst_5 = arith.constant 0.000000e+00 : f32
    %6 = vector.broadcast %cst_5 : f32 to vector<64x128xf32>
    %7 = arith.cmpf ogt, %5, %6 : vector<64x128xf32>
    %cst_6 = arith.constant 2.000000e-01 : f32
    %8 = vector.broadcast %cst_6 : f32 to vector<64x128xf32>
    %9 = arith.mulf %8, %5 : vector<64x128xf32>
    %10 = arith.select %7, %5, %9 : vector<64x128xi1>, vector<64x128xf32>
    %c0_7 = arith.constant 0 : index
    %c0_8 = arith.constant 0 : index
    %11 = vector.load %arg4[%c0_7, %c0_8] : memref<32x64xbf16, #tpu.memory_space<vmem>>, vector<32x64xbf16>
    %12 = arith.truncf %10 : vector<64x128xf32> to vector<64x128xbf16>
    %cst_9 = arith.constant dense<0.000000e+00> : vector<32x128xf32>
    %13 = tpu.matmul %11, %12, %cst_9 {dimension_numbers = #tpu.dot_dimension_numbers<[1], [0], [0], [1], [0, 0, 1, 1], [], []>} : vector<32x64xbf16>, vector<64x128xbf16>, vector<32x128xf32> -> vector<32x128xf32>
    %c0_10 = arith.constant 0 : index
    %c0_11 = arith.constant 0 : index
    %14 = vector.load %arg5[%c0_10, %c0_11] : memref<32x1xf32, #tpu.memory_space<vmem>>, vector<32x1xf32>
    %15 = vector.broadcast %14 : vector<32x1xf32> to vector<32x128xf32>
    %16 = arith.addf %13, %15 : vector<32x128xf32>
    %cst_12 = arith.constant 0.000000e+00 : f32
    %17 = vector.broadcast %cst_12 : f32 to vector<32x128xf32>
    %18 = arith.cmpf ogt, %16, %17 : vector<32x128xf32>
    %cst_13 = arith.constant 2.000000e-01 : f32
    %19 = vector.broadcast %cst_13 : f32 to vector<32x128xf32>
    %20 = arith.mulf %19, %16 : vector<32x128xf32>
    %21 = arith.select %18, %16, %20 : vector<32x128xi1>, vector<32x128xf32>
    %c0_14 = arith.constant 0 : index
    %c0_15 = arith.constant 0 : index
    %22 = vector.load %arg6[%c0_14, %c0_15] : memref<32x1xf32, #tpu.memory_space<vmem>>, vector<32x1xf32>
    %23 = vector.broadcast %22 : vector<32x1xf32> to vector<32x128xf32>
    %24 = arith.mulf %21, %23 : vector<32x128xf32>
    %cst_16 = arith.constant dense<0.000000e+00> : vector<128xf32>
    %25 = vector.multi_reduction <add>, %24, %cst_16 [0] : vector<32x128xf32> to vector<128xf32>
    %26 = vector.shape_cast %25 : vector<128xf32> to vector<1x128xf32>
    %c0_17 = arith.constant 0 : index
    %c0_18 = arith.constant 0 : index
    %27 = memref.load %arg7[%c0_17, %c0_18] : memref<1x1xf32, #tpu.memory_space<smem>>
    %28 = vector.broadcast %27 : f32 to vector<1x128xf32>
    %29 = arith.addf %26, %28 : vector<1x128xf32>
    %30 = arith.negf %29 : vector<1x128xf32>
    %31 = math.exp %30 : vector<1x128xf32>
    %cst_19 = arith.constant 1.000000e+00 : f32
    %32 = vector.broadcast %cst_19 : f32 to vector<1x128xf32>
    %33 = arith.addf %32, %31 : vector<1x128xf32>
    %34 = arith.divf %32, %33 : vector<1x128xf32>
    %c0_20 = arith.constant 0 : index
    %c0_21 = arith.constant 0 : index
    %35 = vector.load %arg8[%c0_20, %c0_21] : memref<1x128xf32, #tpu.memory_space<vmem>>, vector<1x128xf32>
    tpu.vector_store %arg8[%c0_20, %c0_21], %34 {strides = array<i32>} : memref<1x128xf32, #tpu.memory_space<vmem>>, vector<1x128xf32>,
    return
  }
  func.func @transform_0(%arg0: i32) -> (i32, i32) {
    %c0_i32 = arith.constant 0 : i32
    %c0_i32_0 = arith.constant 0 : i32
    return %c0_i32, %arg0 : i32, i32
  }
  func.func @transform_1(%arg0: i32) -> (i32, i32) {
    %c0_i32 = arith.constant 0 : i32
    %c0_i32_0 = arith.constant 0 : i32
    %c0_i32_1 = arith.constant 0 : i32
    return %c0_i32, %c0_i32_0 : i32, i32
  }
  func.func @transform_2(%arg0: i32) -> (i32, i32) {
    %c0_i32 = arith.constant 0 : i32
    %c0_i32_0 = arith.constant 0 : i32
    %c0_i32_1 = arith.constant 0 : i32
    return %c0_i32, %c0_i32_0 : i32, i32
  }
  func.func @transform_3(%arg0: i32) -> (i32, i32) {
    %c0_i32 = arith.constant 0 : i32
    %c0_i32_0 = arith.constant 0 : i32
    %c0_i32_1 = arith.constant 0 : i32
    return %c0_i32, %c0_i32_0 : i32, i32
  }
  func.func @transform_4(%arg0: i32) -> (i32, i32) {
    %c0_i32 = arith.constant 0 : i32
    %c0_i32_0 = arith.constant 0 : i32
    %c0_i32_1 = arith.constant 0 : i32
    return %c0_i32, %c0_i32_0 : i32, i32
  }
  func.func @transform_5(%arg0: i32) -> (i32, i32) {
    %c0_i32 = arith.constant 0 : i32
    %c0_i32_0 = arith.constant 0 : i32
    %c0_i32_1 = arith.constant 0 : i32
    return %c0_i32, %c0_i32_0 : i32, i32
  }
  func.func @transform_6(%arg0: i32) -> (i32, i32) {
    %c0_i32 = arith.constant 0 : i32
    %c0_i32_0 = arith.constant 0 : i32
    %c0_i32_1 = arith.constant 0 : i32
    return %c0_i32, %c0_i32_0 : i32, i32
  }
  func.func @transform_7(%arg0: i32) -> (i32, i32) {
    %c0_i32 = arith.constant 0 : i32
    %c0_i32_0 = arith.constant 0 : i32
    return %c0_i32, %arg0 : i32, i32
  }
}

module attributes {stable_mosaic.version = 11 : i64} {
  func.func @_mlp_kernel(%arg0: i32, %arg1: memref<32x128xbf16, #tpu.memory_space<vmem>>, %arg2: memref<64x32xbf16, #tpu.memory_space<vmem>>, %arg3: memref<64x1xf32, #tpu.memory_space<vmem>>, %arg4: memref<32x64xbf16, #tpu.memory_space<vmem>>, %arg5: memref<32x1xf32, #tpu.memory_space<vmem>>, %arg6: memref<32x1xf32, #tpu.memory_space<vmem>>, %arg7: memref<1x1xf32, #tpu.memory_space<smem>>, %arg8: memref<1x128xf32, #tpu.memory_space<vmem>>) attributes {dimension_semantics = [#tpu.dimension_semantics<parallel>], iteration_bounds = array<i64: 1>, scalar_prefetch = 0 : i64, scratch_operands = 0 : i64, tpu.core_type = #tpu.core_type<tc>, window_params = [{transform_indices = @transform_0, window_bounds = array<i64: 32, 128>}, {pipeline_mode = #tpu.pipeline_mode<synchronous>, transform_indices = @transform_1, window_bounds = array<i64: 64, 32>}, {pipeline_mode = #tpu.pipeline_mode<synchronous>, transform_indices = @transform_2, window_bounds = array<i64: 64, 1>}, {pipeline_mode = #tpu.pipeline_mode<synchronous>, transform_indices = @transform_3, window_bounds = array<i64: 32, 64>}, {pipeline_mode = #tpu.pipeline_mode<synchronous>, transform_indices = @transform_4, window_bounds = array<i64: 32, 1>}, {pipeline_mode = #tpu.pipeline_mode<synchronous>, transform_indices = @transform_5, window_bounds = array<i64: 32, 1>}, {transform_indices = @transform_6, window_bounds = array<i64: 1, 1>}, {transform_indices = @transform_7, window_bounds = array<i64: 1, 128>}]} {
    %c0 = arith.constant 0 : index
    %c0_0 = arith.constant 0 : index
    %0 = vector.load %arg1[%c0, %c0_0] : memref<32x128xbf16, #tpu.memory_space<vmem>>, vector<32x128xbf16>
    %c0_1 = arith.constant 0 : index
    %c0_2 = arith.constant 0 : index
    %1 = vector.load %arg2[%c0_1, %c0_2] : memref<64x32xbf16, #tpu.memory_space<vmem>>, vector<64x32xbf16>
    %cst = arith.constant dense<0.000000e+00> : vector<64x128xf32>
    %2 = tpu.matmul %1, %0, %cst {dimension_numbers = #tpu.dot_dimension_numbers<[1], [0], [0], [1], [0, 0, 1, 1], [], []>} : vector<64x32xbf16>, vector<32x128xbf16>, vector<64x128xf32> -> vector<64x128xf32>
    %c0_3 = arith.constant 0 : index
    %c0_4 = arith.constant 0 : index
    %3 = vector.load %arg3[%c0_3, %c0_4] : memref<64x1xf32, #tpu.memory_space<vmem>>, vector<64x1xf32>
    %4 = vector.broadcast %3 : vector<64x1xf32> to vector<64x128xf32>
    %5 = arith.addf %2, %4 : vector<64x128xf32>
    %cst_5 = arith.constant 0.000000e+00 : f32
    %6 = vector.broadcast %cst_5 : f32 to vector<64x128xf32>
    %7 = arith.cmpf ogt, %5, %6 : vector<64x128xf32>
    %cst_6 = arith.constant 2.000000e-01 : f32
    %8 = vector.broadcast %cst_6 : f32 to vector<64x128xf32>
    %9 = arith.mulf %8, %5 : vector<64x128xf32>
    %10 = arith.select %7, %5, %9 : vector<64x128xi1>, vector<64x128xf32>
    %c0_7 = arith.constant 0 : index
    %c0_8 = arith.constant 0 : index
    %11 = vector.load %arg4[%c0_7, %c0_8] : memref<32x64xbf16, #tpu.memory_space<vmem>>, vector<32x64xbf16>
    %12 = arith.truncf %10 : vector<64x128xf32> to vector<64x128xbf16>
    %cst_9 = arith.constant dense<0.000000e+00> : vector<32x128xf32>
    %13 = tpu.matmul %11, %12, %cst_9 {dimension_numbers = #tpu.dot_dimension_numbers<[1], [0], [0], [1], [0, 0, 1, 1], [], []>} : vector<32x64xbf16>, vector<64x128xbf16>, vector<32x128xf32> -> vector<32x128xf32>
    %c0_10 = arith.constant 0 : index
    %c0_11 = arith.constant 0 : index
    %14 = vector.load %arg5[%c0_10, %c0_11] : memref<32x1xf32, #tpu.memory_space<vmem>>, vector<32x1xf32>
    %15 = vector.broadcast %14 : vector<32x1xf32> to vector<32x128xf32>
    %16 = arith.addf %13, %15 : vector<32x128xf32>
    %cst_12 = arith.constant 0.000000e+00 : f32
    %17 = vector.broadcast %cst_12 : f32 to vector<32x128xf32>
    %18 = arith.cmpf ogt, %16, %17 : vector<32x128xf32>
    %cst_13 = arith.constant 2.000000e-01 : f32
    %19 = vector.broadcast %cst_13 : f32 to vector<32x128xf32>
    %20 = arith.mulf %19, %16 : vector<32x128xf32>
    %21 = arith.select %18, %16, %20 : vector<32x128xi1>, vector<32x128xf32>
    %c0_14 = arith.constant 0 : index
    %c0_15 = arith.constant 0 : index
    %22 = vector.load %arg6[%c0_14, %c0_15] : memref<32x1xf32, #tpu.memory_space<vmem>>, vector<32x1xf32>
    %23 = vector.broadcast %22 : vector<32x1xf32> to vector<32x128xf32>
    %24 = arith.mulf %21, %23 : vector<32x128xf32>
    %cst_16 = arith.constant dense<0.000000e+00> : vector<128xf32>
    %25 = vector.multi_reduction <add>, %24, %cst_16 [0] : vector<32x128xf32> to vector<128xf32>
    %26 = vector.shape_cast %25 : vector<128xf32> to vector<1x128xf32>
    %c0_17 = arith.constant 0 : index
    %c0_18 = arith.constant 0 : index
    %27 = memref.load %arg7[%c0_17, %c0_18] : memref<1x1xf32, #tpu.memory_space<smem>>
    %28 = vector.broadcast %27 : f32 to vector<1x128xf32>
    %29 = arith.addf %26, %28 : vector<1x128xf32>
    %30 = arith.negf %29 : vector<1x128xf32>
    %31 = math.exp %30 : vector<1x128xf32>
    %cst_19 = arith.constant 1.000000e+00 : f32
    %32 = vector.broadcast %cst_19 : f32 to vector<1x128xf32>
    %33 = arith.addf %32, %31 : vector<1x128xf32>
    %34 = arith.divf %32, %33 : vector<1x128xf32>
    %c0_20 = arith.constant 0 : index
    %c0_21 = arith.constant 0 : index
    %35 = vector.load %arg8[%c0_20, %c0_21] : memref<1x128xf32, #tpu.memory_space<vmem>>, vector<1x128xf32>
    tpu.vector_store %arg8[%c0_20, %c0_21], %34 {strides = array<i32>} : memref<1x128xf32, #tpu.memory_space<vmem>>, vector<1x128xf32>,
    return
  }
  func.func @transform_0(%arg0: i32) -> (i32, i32) {
    %c0_i32 = arith.constant 0 : i32
    %c0_i32_0 = arith.constant 0 : i32
    return %c0_i32, %arg0 : i32, i32
  }
  func.func @transform_1(%arg0: i32) -> (i32, i32) {
    %c0_i32 = arith.constant 0 : i32
    %c0_i32_0 = arith.constant 0 : i32
    %c0_i32_1 = arith.constant 0 : i32
    return %c0_i32, %c0_i32_0 : i32, i32
  }
  func.func @transform_2(%arg0: i32) -> (i32, i32) {
    %c0_i32 = arith.constant 0 : i32
    %c0_i32_0 = arith.constant 0 : i32
    %c0_i32_1 = arith.constant 0 : i32
    return %c0_i32, %c0_i32_0 : i32, i32
  }
  func.func @transform_3(%arg0: i32) -> (i32, i32) {
    %c0_i32 = arith.constant 0 : i32
    %c0_i32_0 = arith.constant 0 : i32
    %c0_i32_1 = arith.constant 0 : i32
    return %c0_i32, %c0_i32_0 : i32, i32
  }
  func.func @transform_4(%arg0: i32) -> (i32, i32) {
    %c0_i32 = arith.constant 0 : i32
    %c0_i32_0 = arith.constant 0 : i32
    %c0_i32_1 = arith.constant 0 : i32
    return %c0_i32, %c0_i32_0 : i32, i32
  }
  func.func @transform_5(%arg0: i32) -> (i32, i32) {
    %c0_i32 = arith.constant 0 : i32
    %c0_i32_0 = arith.constant 0 : i32
    %c0_i32_1 = arith.constant 0 : i32
    return %c0_i32, %c0_i32_0 : i32, i32
  }
  func.func @transform_6(%arg0: i32) -> (i32, i32) {
    %c0_i32 = arith.constant 0 : i32
    %c0_i32_0 = arith.constant 0 : i32
    %c0_i32_1 = arith.constant 0 : i32
    return %c0_i32, %c0_i32_0 : i32, i32
  }
  func.func @transform_7(%arg0: i32) -> (i32, i32) {
    %c0_i32 = arith.constant 0 : i32
    %c0_i32_0 = arith.constant 0 : i32
    return %c0_i32, %arg0 : i32, i32
  }
}

</mosaic_0001>

<llo_original>
// kernel: tpu_custom_call.1
$region0: #{tpu_custom_call.1}
  #allocation0 [shape = 'u32[]', space=smem, size = 0x4, offset = 0x4, fixed_abs, tag = 'smem constant byte address 0x4 - core index']
  #allocation1 [shape = 'u32[144,128]{1,0:T(1,128)}', space=vmem, size = 0x12000, scoped, tag = 'internal scratch']
  #allocation2 [shape = 'f32[1,1]{1,0:T(1,128)S(6)}', space=smem, size = 0x200, scoped, tag = 'scoped memory for tpu_custom_call.1']
  %s0 = inlined_call_operand.vmem [shape: bf16[32,2], index: 0, kind: input, shape index: {}]
  %s1 = inlined_call_operand.vmem [shape: bf16[64,32], index: 1, kind: input, shape index: {}]
  %s2 = inlined_call_operand.vmem [shape: f32[64,1], index: 2, kind: input, shape index: {}]
  %s3 = inlined_call_operand.vmem [shape: bf16[32,64], index: 3, kind: input, shape index: {}]
  %s4 = inlined_call_operand.vmem [shape: f32[32,1], index: 4, kind: input, shape index: {}]
  %s5 = inlined_call_operand.vmem [shape: f32[32,1], index: 5, kind: input, shape index: {}]
  %s6 = inlined_call_operand.<no memory space> [shape: f32[1,1], index: 6, kind: input, shape index: {}]
  %s7 = inlined_call_operand.hbm [shape: f32[1,2], index: 7, kind: output, shape index: {}]
  %s8 = sld [smem:[#allocation0]]
  $region38: #{tpu_custom_call.1} parent=0
    _
  %s10 = ssub.s32 1, %s8
  %s11 = scalar_select 0, %s10, %s8
  %12 = sst [smem:[#allocation2]] %s6
  $region1: #{tpu_custom_call.1} parent=0
    #allocation3 [shape = 'u8[512]{0}', space=vmem, size = 0x400, scoped, tag = 'output window, operand 0, single buffered']
    #allocation4 [shape = 's32[1]{0}', space=sflag, size = 0x4, scoped, tag = 'scoped memory for tpu_custom_call.1']
    %13 = vsyncpa [#allocation4], 0
    // Predicated region
    $region2: #{tpu_custom_call.1} parent=1 // pred_check
      _
    $region3: #{tpu_custom_call.1} parent=1 // pred_check_branch
      %15 = sbr.rel (0) target = $region5
    $region4: #{tpu_custom_call.1} parent=1 // pred_region
      _
    $region5: #{tpu_custom_call.1} parent=1 // pred_fallthru
      _
    // Predicated region
    $region6: #{tpu_custom_call.1} parent=1 // pred_check
      _
    $region7: #{tpu_custom_call.1} parent=1 // pred_check_branch
      %17 = sbr.rel (0) target = $region9
    $region8: #{tpu_custom_call.1} parent=1 // pred_region
      _
    $region9: #{tpu_custom_call.1} parent=1 // pred_fallthru
      _
    // Predicated region
    $region10: #{tpu_custom_call.1} parent=1 // pred_check
      _
    $region11: #{tpu_custom_call.1} parent=1 // pred_check_branch
      %19 = sbr.rel (0) target = $region13
    $region12: #{tpu_custom_call.1} parent=1 // pred_region
      _
    $region13: #{tpu_custom_call.1} parent=1 // pred_fallthru
      _
    // Predicated region
    $region14: #{tpu_custom_call.1} parent=1 // pred_check
      _
    $region15: #{tpu_custom_call.1} parent=1 // pred_check_branch
      %21 = sbr.rel (0) target = $region17
    $region16: #{tpu_custom_call.1} parent=1 // pred_region
      _
    $region17: #{tpu_custom_call.1} parent=1 // pred_fallthru
      _
    // Predicated region
    $region18: #{tpu_custom_call.1} parent=1 // pred_check
      _
    $region19: #{tpu_custom_call.1} parent=1 // pred_check_branch
      %23 = sbr.rel (0) target = $region21
    $region20: #{tpu_custom_call.1} parent=1 // pred_region
      _
    $region21: #{tpu_custom_call.1} parent=1 // pred_fallthru
      _
    // Predicated region
    $region22: #{tpu_custom_call.1} parent=1 // pred_check
      _
    $region23: #{tpu_custom_call.1} parent=1 // pred_check_branch
      %25 = sbr.rel (0) target = $region25
    $region24: #{tpu_custom_call.1} parent=1 // pred_region
      _
    $region25: #{tpu_custom_call.1} parent=1 // pred_fallthru
      _
    // Predicated region
    $region26: #{tpu_custom_call.1} parent=1 // pred_check
      _
    $region27: #{tpu_custom_call.1} parent=1 // pred_check_branch
      %27 = sbr.rel (0) target = $region29
    $region28: #{tpu_custom_call.1} parent=1 // pred_region
      _
    $region29: #{tpu_custom_call.1} parent=1 // pred_fallthru
      _
    %v29 = vld [vmem:[%s0] sm:$0xf]
    %v30 = vld [vmem:[%s0 + $0x4] sm:$0xf]
    %v31 = vld [vmem:[%s0 + $0x8] sm:$0xf]
    %v32 = vld [vmem:[%s0 + $0xc] sm:$0xf]
    %v33 = vld [vmem:[%s1] sm:$0xf]
    %v34 = vld [vmem:[%s1 + $0x4] sm:$0xf]
    %v35 = vld [vmem:[%s1 + $0x8] sm:$0xf]
    %v36 = vld [vmem:[%s1 + $0xc] sm:$0xf]
    %v37 = vld [vmem:[%s1 + $0x10] sm:$0xf]
    %v38 = vld [vmem:[%s1 + $0x14] sm:$0xf]
    %v39 = vld [vmem:[%s1 + $0x18] sm:$0xf]
    %v40 = vld [vmem:[%s1 + $0x1c] sm:$0xf]
    %v41 = vld [vmem:[%s2] sm:$0xff]
    %v42 = vld [vmem:[%s2 + $0x8] sm:$0xff]
    %v43 = vld [vmem:[%s2 + $0x10] sm:$0xff]
    %v44 = vld [vmem:[%s2 + $0x18] sm:$0xff]
    %v45 = vld [vmem:[%s2 + $0x20] sm:$0xff]
    %v46 = vld [vmem:[%s2 + $0x28] sm:$0xff]
    %v47 = vld [vmem:[%s2 + $0x30] sm:$0xff]
    %v48 = vld [vmem:[%s2 + $0x38] sm:$0xff]
    %50 = vset.pattern.permute.xlu0 0
    %51 = vperm.xlu0 %50, %v41
    %v52 = vpop.permute.xlu0 %51
    %55 = vset.pattern.permute.xlu0 0
    %56 = vperm.xlu0 %55, %v42
    %v57 = vpop.permute.xlu0 %56
    %60 = vset.pattern.permute.xlu0 0
    %61 = vperm.xlu0 %60, %v43
    %v62 = vpop.permute.xlu0 %61
    %65 = vset.pattern.permute.xlu0 0
    %66 = vperm.xlu0 %65, %v44
    %v67 = vpop.permute.xlu0 %66
    %70 = vset.pattern.permute.xlu0 0
    %71 = vperm.xlu0 %70, %v45
    %v72 = vpop.permute.xlu0 %71
    %75 = vset.pattern.permute.xlu0 0
    %76 = vperm.xlu0 %75, %v46
    %v77 = vpop.permute.xlu0 %76
    %80 = vset.pattern.permute.xlu0 0
    %81 = vperm.xlu0 %80, %v47
    %v82 = vpop.permute.xlu0 %81
    %85 = vset.pattern.permute.xlu0 0
    %86 = vperm.xlu0 %85, %v48
    %v87 = vpop.permute.xlu0 %86
    %v97 = vunpack.c.l.b16 %v33
    %v98 = vunpack.c.l.b16 %v34
    %v99 = vunpack.c.l.b16 %v35
    %v100 = vunpack.c.l.b16 %v36
    %v101 = vunpack.c.l.b16 %v37
    %v102 = vunpack.c.l.b16 %v38
    %v103 = vunpack.c.l.b16 %v39
    %v104 = vunpack.c.l.b16 %v40
    %v105 = vpack.c.b16 %v98, %v97
    %v106 = vpack.c.b16 %v100, %v99
    %v107 = vpack.c.b16 %v102, %v101
    %v108 = vpack.c.b16 %v104, %v103
    %v113 = vunpack.c.l.b16 %v29
    %v114 = vunpack.c.l.b16 %v30
    %v115 = vunpack.c.l.b16 %v31
    %v116 = vunpack.c.l.b16 %v32
    %v117 = vpack.c.b16 %v114, %v113
    %v118 = vpack.c.b16 %v116, %v115
    %vm121 = vcmask 261120
    %v123 = vsel %vm121, %v105, 0
    %v126 = vsel %vm121, %v106, 0
    %v129 = vsel %vm121, %v107, 0
    %v132 = vsel %vm121, %v108, 0
    %134 = vmatprep.subr.bf16.mxu0 0
    %135 = vmatpush1.bf16.msra.mxu0 %v117
    %136 = vmatprep.subr.bf16.mxu0 0
    %137 = vmatpush1.bf16.msra.mxu0 %v118
    %138 = vmatprep.subr.bf16.mxu0 0
    %139 = vmatpush1.bf16.msra.mxu0 0
    %140 = vmatprep.subr.bf16.mxu0 0
    %141 = vmatpush1.bf16.msra.mxu0 0
    %142 = vmatprep.subr.bf16.mxu0 0
    %143 = vmatpush1.bf16.msra.mxu0 0
    %144 = vmatprep.subr.bf16.mxu0 0
    %145 = vmatpush1.bf16.msra.mxu0 0
    %146 = vmatprep.subr.bf16.mxu0 0
    %147 = vmatpush1.bf16.msra.mxu0 0
    %148 = vmatprep.subr.bf16.mxu0 0
    %149 = vmatpush1.bf16.msra.mxu0 0
    %150 = vmatprep.subr.bf16.mxu0 0
    %151 = vmatpush1.bf16.msra.mxu0 0
    %152 = vmatprep.subr.bf16.mxu0 0
    %153 = vmatpush1.bf16.msra.mxu0 0
    %154 = vmatprep.subr.bf16.mxu0 0
    %155 = vmatpush1.bf16.msra.mxu0 0
    %156 = vmatprep.subr.bf16.mxu0 0
    %157 = vmatpush1.bf16.msra.mxu0 0
    %158 = vmatprep.subr.bf16.mxu0 0
    %159 = vmatpush1.bf16.msra.mxu0 0
    %160 = vmatprep.subr.bf16.mxu0 0
    %161 = vmatpush1.bf16.msra.mxu0 0
    %162 = vmatprep.subr.bf16.mxu0 0
    %163 = vmatpush1.bf16.msra.mxu0 0
    %164 = vmatprep.subr.bf16.mxu0 0
    %165 = vmatpush1.bf16.msra.mxu0 0
    %166 = vmatprep.mubr.bf16.mxu0 0
    %167 = vmatmul.mubr.bf16.gmra.mrb[0].mxu0 %v123
    %v168 = vpop.f32.mrb[0].mxu0
    %v169 = vadd.f32 %v52, %v168
    %v170 = vpop.f32.mrb[0].mxu0
    %v171 = vpop.f32.mrb[0].mxu0
    %v172 = vadd.f32 %v57, %v171
    %v173 = vpop.f32.mrb[0].mxu0
    %174 = vmatprep.mubr.bf16.mxu0 0
    %175 = vmatmul.mubr.bf16.gmra.mrb[0].mxu0 %v126
    %v176 = vpop.f32.mrb[0].mxu0
    %v177 = vadd.f32 %v62, %v176
    %v178 = vpop.f32.mrb[0].mxu0
    %v179 = vpop.f32.mrb[0].mxu0
    %v180 = vadd.f32 %v67, %v179
    %v181 = vpop.f32.mrb[0].mxu0
    %182 = vmatprep.mubr.bf16.mxu0 0
    %183 = vmatmul.mubr.bf16.gmra.mrb[0].mxu0 %v129
    %v184 = vpop.f32.mrb[0].mxu0
    %v185 = vadd.f32 %v72, %v184
    %v186 = vpop.f32.mrb[0].mxu0
    %v187 = vpop.f32.mrb[0].mxu0
    %v188 = vadd.f32 %v77, %v187
    %v189 = vpop.f32.mrb[0].mxu0
    %190 = vmatprep.mubr.bf16.mxu0 0
    %191 = vmatmul.mubr.bf16.gmra.mrb[0].mxu0 %v132
    %v192 = vpop.f32.mrb[0].mxu0
    %v193 = vadd.f32 %v82, %v192
    %v194 = vpop.f32.mrb[0].mxu0
    %v195 = vpop.f32.mrb[0].mxu0
    %v196 = vadd.f32 %v87, %v195
    %v197 = vpop.f32.mrb[0].mxu0
    %198 = vdwg.mxu0
    %vm199 = vcmp.gt.f32.partialorder %v169, 0.0
    %vm200 = vcmp.gt.f32.partialorder %v172, 0.0
    %vm201 = vcmp.gt.f32.partialorder %v177, 0.0
    %vm202 = vcmp.gt.f32.partialorder %v180, 0.0
    %vm203 = vcmp.gt.f32.partialorder %v185, 0.0
    %vm204 = vcmp.gt.f32.partialorder %v188, 0.0
    %vm205 = vcmp.gt.f32.partialorder %v193, 0.0
    %vm206 = vcmp.gt.f32.partialorder %v196, 0.0
    %v207 = vmul.f32 %v169, 0.2
    %v208 = vmul.f32 %v172, 0.2
    %v209 = vmul.f32 %v177, 0.2
    %v210 = vmul.f32 %v180, 0.2
    %v211 = vmul.f32 %v185, 0.2
    %v212 = vmul.f32 %v188, 0.2
    %v213 = vmul.f32 %v193, 0.2
    %v214 = vmul.f32 %v196, 0.2
    %v215 = vsel %vm199, %v169, %v207
    %v216 = vsel %vm200, %v172, %v208
    %v217 = vsel %vm201, %v177, %v209
    %v218 = vsel %vm202, %v180, %v210
    %v219 = vsel %vm203, %v185, %v211
    %v220 = vsel %vm204, %v188, %v212
    %v221 = vsel %vm205, %v193, %v213
    %v222 = vsel %vm206, %v196, %v214
    %v223 = vld [vmem:[%s3] sm:$0xf]
    %v224 = vld [vmem:[%s3 + $0x4] sm:$0xf]
    %v225 = vld [vmem:[%s3 + $0x8] sm:$0xf]
    %v226 = vld [vmem:[%s3 + $0xc] sm:$0xf]
    %v227 = vpack.c.bf16 %v216, %v215
    %v228 = vpack.c.bf16 %v218, %v217
    %v229 = vpack.c.bf16 %v220, %v219
    %v230 = vpack.c.bf16 %v222, %v221
    %v231 = vld [vmem:[%s4] sm:$0xff]
    %v232 = vld [vmem:[%s4 + $0x8] sm:$0xff]
    %v233 = vld [vmem:[%s4 + $0x10] sm:$0xff]
    %v234 = vld [vmem:[%s4 + $0x18] sm:$0xff]
    %236 = vset.pattern.permute.xlu0 0
    %237 = vperm.xlu0 %236, %v231
    %v238 = vpop.permute.xlu0 %237
    %241 = vset.pattern.permute.xlu0 0
    %242 = vperm.xlu0 %241, %v232
    %v243 = vpop.permute.xlu0 %242
    %246 = vset.pattern.permute.xlu0 0
    %247 = vperm.xlu0 %246, %v233
    %v248 = vpop.permute.xlu0 %247
    %251 = vset.pattern.permute.xlu0 0
    %252 = vperm.xlu0 %251, %v234
    %v253 = vpop.permute.xlu0 %252
    %v259 = vunpack.c.l.b16 %v223
    %v260 = vunpack.c.l.b16 %v224
    %v261 = vunpack.c.l.b16 %v225
    %v262 = vunpack.c.l.b16 %v226
    %v263 = vpack.c.b16 %v260, %v259
    %v264 = vpack.c.b16 %v262, %v261
    %vm265 = vcmask 523264
    %v267 = vsel %vm265, %v263, 0
    %v270 = vsel %vm265, %v264, 0
    %272 = vmatprep.subr.bf16.mxu0 0
    %273 = vmatpush1.bf16.msra.mxu0 %v227
    %274 = vmatprep.subr.bf16.mxu0 0
    %275 = vmatpush1.bf16.msra.mxu0 %v228
    %276 = vmatprep.subr.bf16.mxu0 0
    %277 = vmatpush1.bf16.msra.mxu0 %v229
    %278 = vmatprep.subr.bf16.mxu0 0
    %279 = vmatpush1.bf16.msra.mxu0 %v230
    %280 = vmatprep.subr.bf16.mxu0 0
    %281 = vmatpush1.bf16.msra.mxu0 0
    %282 = vmatprep.subr.bf16.mxu0 0
    %283 = vmatpush1.bf16.msra.mxu0 0
    %284 = vmatprep.subr.bf16.mxu0 0
    %285 = vmatpush1.bf16.msra.mxu0 0
    %286 = vmatprep.subr.bf16.mxu0 0
    %287 = vmatpush1.bf16.msra.mxu0 0
    %288 = vmatprep.subr.bf16.mxu0 0
    %289 = vmatpush1.bf16.msra.mxu0 0
    %290 = vmatprep.subr.bf16.mxu0 0
    %291 = vmatpush1.bf16.msra.mxu0 0
    %292 = vmatprep.subr.bf16.mxu0 0
    %293 = vmatpush1.bf16.msra.mxu0 0
    %294 = vmatprep.subr.bf16.mxu0 0
    %295 = vmatpush1.bf16.msra.mxu0 0
    %296 = vmatprep.subr.bf16.mxu0 0
    %297 = vmatpush1.bf16.msra.mxu0 0
    %298 = vmatprep.subr.bf16.mxu0 0
    %299 = vmatpush1.bf16.msra.mxu0 0
    %300 = vmatprep.subr.bf16.mxu0 0
    %301 = vmatpush1.bf16.msra.mxu0 0
    %302 = vmatprep.subr.bf16.mxu0 0
    %303 = vmatpush1.bf16.msra.mxu0 0
    %304 = vmatprep.mubr.bf16.mxu0 0
    %305 = vmatmul.mubr.bf16.gmra.mrb[0].mxu0 %v267
    %v306 = vpop.f32.mrb[0].mxu0
    %v307 = vadd.f32 %v238, %v306
    %v308 = vpop.f32.mrb[0].mxu0
    %v309 = vpop.f32.mrb[0].mxu0
    %v310 = vadd.f32 %v243, %v309
    %v311 = vpop.f32.mrb[0].mxu0
    %312 = vmatprep.mubr.bf16.mxu0 0
    %313 = vmatmul.mubr.bf16.gmra.mrb[0].mxu0 %v270
    %v314 = vpop.f32.mrb[0].mxu0
    %v315 = vadd.f32 %v248, %v314
    %v316 = vpop.f32.mrb[0].mxu0
    %v317 = vpop.f32.mrb[0].mxu0
    %v318 = vadd.f32 %v253, %v317
    %v319 = vpop.f32.mrb[0].mxu0
    %320 = vdwg.mxu0
    %vm321 = vcmp.gt.f32.partialorder %v307, 0.0
    %vm322 = vcmp.gt.f32.partialorder %v310, 0.0
    %vm323 = vcmp.gt.f32.partialorder %v315, 0.0
    %vm324 = vcmp.gt.f32.partialorder %v318, 0.0
    %v325 = vmul.f32 %v307, 0.2
    %v326 = vmul.f32 %v310, 0.2
    %v327 = vmul.f32 %v315, 0.2
    %v328 = vmul.f32 %v318, 0.2
    %v329 = vsel %vm321, %v307, %v325
    %v330 = vsel %vm322, %v310, %v326
    %v331 = vsel %vm323, %v315, %v327
    %v332 = vsel %vm324, %v318, %v328
    %v333 = vld [vmem:[%s5] sm:$0xff]
    %v334 = vld [vmem:[%s5 + $0x8] sm:$0xff]
    %v335 = vld [vmem:[%s5 + $0x10] sm:$0xff]
    %v336 = vld [vmem:[%s5 + $0x18] sm:$0xff]
    %338 = vset.pattern.permute.xlu0 0
    %339 = vperm.xlu0 %338, %v333
    %v340 = vpop.permute.xlu0 %339
    %343 = vset.pattern.permute.xlu0 0
    %344 = vperm.xlu0 %343, %v334
    %v345 = vpop.permute.xlu0 %344
    %348 = vset.pattern.permute.xlu0 0
    %349 = vperm.xlu0 %348, %v335
    %v350 = vpop.permute.xlu0 %349
    %353 = vset.pattern.permute.xlu0 0
    %354 = vperm.xlu0 %353, %v336
    %v355 = vpop.permute.xlu0 %354
    %v357 = vmul.f32 %v329, %v340
    %v358 = vmul.f32 %v330, %v345
    %v359 = vmul.f32 %v331, %v350
    %v360 = vmul.f32 %v332, %v355
    %v361 = vadd.f32 %v357, %v358
    %v362 = vadd.f32 %v361, %v359
    %v363 = vadd.f32 %v362, %v360
    %v364 = vrot.slane %v363, 4
    %v365 = vadd.f32 %v363, %v364
    %v366 = vrot.slane %v365, 2
    %v367 = vadd.f32 %v365, %v366
    %v368 = vrot.slane %v367, 1
    %v369 = vadd.f32 %v367, %v368
    %s370 = sld [smem:[#allocation2]]
    %v371 = vstv %s370
    %v372 = vadd.f32 %v369, %v371
    %v373 = vxor.u32 %v372, 2147483648
    %v374 = vmul.f32 %v373, 1.442695
    %v375 = vpow.pop %v374
    %v376 = vadd.f32 %v375, 1.0
    %v377 = vrcp.pop %v376
    %v378 = vmul.f32 1.0, %v377
    %379 = vst [vmem:[#allocation3] sm:$0x1] %v378
    // Predicated region
    $region30: #{tpu_custom_call.1} parent=1 // pred_check
      _
    $region31: #{tpu_custom_call.1} parent=1 // pred_check_branch
      %381 = sbr.rel (0) target = $region33
    $region32: #{tpu_custom_call.1} parent=1 // pred_region
      %s383 = ssub.s32 16, 16
      %384 = vsyncadd [#allocation4], %s383
      %s386 = sshll.u32 [#allocation3], 4
      %s387 = int_to_ptr.vmem [resolvable:$true] %s386
      %389 = dma.vmem_to_hbm [thread:$0]  %s387, 16, %s7, [#allocation4]
    $region33: #{tpu_custom_call.1} parent=1 // pred_fallthru
      _
    // Predicated region
    $region34: #{tpu_custom_call.1} parent=1 // pred_check
      _
    $region35: #{tpu_custom_call.1} parent=1 // pred_check_branch
      %391 = sbr.rel (0) target = $region37
    $region36: #{tpu_custom_call.1} parent=1 // pred_region
      %392 = dma.done [#allocation4], 16
    $region37: #{tpu_custom_call.1} parent=1 // pred_fallthru
      _
    %393 = vsyncpa [#allocation4], 1

// kernel: tpu_custom_call.1
$region0: #{tpu_custom_call.1}
  #allocation0 [shape = 'u32[]', space=smem, size = 0x4, offset = 0x4, fixed_abs, tag = 'smem constant byte address 0x4 - core index']
  #allocation1 [shape = 'u32[144,128]{1,0:T(1,128)}', space=vmem, size = 0x12000, scoped, tag = 'internal scratch']
  #allocation2 [shape = 'f32[1,1]{1,0:T(1,128)S(6)}', space=smem, size = 0x200, scoped, tag = 'scoped memory for tpu_custom_call.1']
  %s0 = inlined_call_operand.vmem [shape: bf16[32,2], index: 0, kind: input, shape index: {}]
  %s1 = inlined_call_operand.vmem [shape: bf16[64,32], index: 1, kind: input, shape index: {}]
  %s2 = inlined_call_operand.vmem [shape: f32[64,1], index: 2, kind: input, shape index: {}]
  %s3 = inlined_call_operand.vmem [shape: bf16[32,64], index: 3, kind: input, shape index: {}]
  %s4 = inlined_call_operand.vmem [shape: f32[32,1], index: 4, kind: input, shape index: {}]
  %s5 = inlined_call_operand.vmem [shape: f32[32,1], index: 5, kind: input, shape index: {}]
  %s6 = inlined_call_operand.<no memory space> [shape: f32[1,1], index: 6, kind: input, shape index: {}]
  %s7 = inlined_call_operand.hbm [shape: f32[1,2], index: 7, kind: output, shape index: {}]
  %s8 = sld [smem:[#allocation0]]
  $region38: #{tpu_custom_call.1} parent=0
    _
  %s10 = ssub.s32 1, %s8
  %s11 = scalar_select 0, %s10, %s8
  %12 = sst [smem:[#allocation2]] %s6
  $region1: #{tpu_custom_call.1} parent=0
    #allocation3 [shape = 'u8[512]{0}', space=vmem, size = 0x400, scoped, tag = 'output window, operand 0, single buffered']
    #allocation4 [shape = 's32[1]{0}', space=sflag, size = 0x4, scoped, tag = 'scoped memory for tpu_custom_call.1']
    %13 = vsyncpa [#allocation4], 0
    // Predicated region
    $region2: #{tpu_custom_call.1} parent=1 // pred_check
      _
    $region3: #{tpu_custom_call.1} parent=1 // pred_check_branch
      %15 = sbr.rel (0) target = $region5
    $region4: #{tpu_custom_call.1} parent=1 // pred_region
      _
    $region5: #{tpu_custom_call.1} parent=1 // pred_fallthru
      _
    // Predicated region
    $region6: #{tpu_custom_call.1} parent=1 // pred_check
      _
    $region7: #{tpu_custom_call.1} parent=1 // pred_check_branch
      %17 = sbr.rel (0) target = $region9
    $region8: #{tpu_custom_call.1} parent=1 // pred_region
      _
    $region9: #{tpu_custom_call.1} parent=1 // pred_fallthru
      _
    // Predicated region
    $region10: #{tpu_custom_call.1} parent=1 // pred_check
      _
    $region11: #{tpu_custom_call.1} parent=1 // pred_check_branch
      %19 = sbr.rel (0) target = $region13
    $region12: #{tpu_custom_call.1} parent=1 // pred_region
      _
    $region13: #{tpu_custom_call.1} parent=1 // pred_fallthru
      _
    // Predicated region
    $region14: #{tpu_custom_call.1} parent=1 // pred_check
      _
    $region15: #{tpu_custom_call.1} parent=1 // pred_check_branch
      %21 = sbr.rel (0) target = $region17
    $region16: #{tpu_custom_call.1} parent=1 // pred_region
      _
    $region17: #{tpu_custom_call.1} parent=1 // pred_fallthru
      _
    // Predicated region
    $region18: #{tpu_custom_call.1} parent=1 // pred_check
      _
    $region19: #{tpu_custom_call.1} parent=1 // pred_check_branch
      %23 = sbr.rel (0) target = $region21
    $region20: #{tpu_custom_call.1} parent=1 // pred_region
      _
    $region21: #{tpu_custom_call.1} parent=1 // pred_fallthru
      _
    // Predicated region
    $region22: #{tpu_custom_call.1} parent=1 // pred_check
      _
    $region23: #{tpu_custom_call.1} parent=1 // pred_check_branch
      %25 = sbr.rel (0) target = $region25
    $region24: #{tpu_custom_call.1} parent=1 // pred_region
      _
    $region25: #{tpu_custom_call.1} parent=1 // pred_fallthru
      _
    // Predicated region
    $region26: #{tpu_custom_call.1} parent=1 // pred_check
      _
    $region27: #{tpu_custom_call.1} parent=1 // pred_check_branch
      %27 = sbr.rel (0) target = $region29
    $region28: #{tpu_custom_call.1} parent=1 // pred_region
      _
    $region29: #{tpu_custom_call.1} parent=1 // pred_fallthru
      _
    %v29 = vld [vmem:[%s0] sm:$0xf]
    %v30 = vld [vmem:[%s0 + $0x4] sm:$0xf]
    %v31 = vld [vmem:[%s0 + $0x8] sm:$0xf]
    %v32 = vld [vmem:[%s0 + $0xc] sm:$0xf]
    %v33 = vld [vmem:[%s1] sm:$0xf]
    %v34 = vld [vmem:[%s1 + $0x4] sm:$0xf]
    %v35 = vld [vmem:[%s1 + $0x8] sm:$0xf]
    %v36 = vld [vmem:[%s1 + $0xc] sm:$0xf]
    %v37 = vld [vmem:[%s1 + $0x10] sm:$0xf]
    %v38 = vld [vmem:[%s1 + $0x14] sm:$0xf]
    %v39 = vld [vmem:[%s1 + $0x18] sm:$0xf]
    %v40 = vld [vmem:[%s1 + $0x1c] sm:$0xf]
    %v41 = vld [vmem:[%s2] sm:$0xff]
    %v42 = vld [vmem:[%s2 + $0x8] sm:$0xff]
    %v43 = vld [vmem:[%s2 + $0x10] sm:$0xff]
    %v44 = vld [vmem:[%s2 + $0x18] sm:$0xff]
    %v45 = vld [vmem:[%s2 + $0x20] sm:$0xff]
    %v46 = vld [vmem:[%s2 + $0x28] sm:$0xff]
    %v47 = vld [vmem:[%s2 + $0x30] sm:$0xff]
    %v48 = vld [vmem:[%s2 + $0x38] sm:$0xff]
    %50 = vset.pattern.permute.xlu0 0
    %51 = vperm.xlu0 %50, %v41
    %v52 = vpop.permute.xlu0 %51
    %55 = vset.pattern.permute.xlu0 0
    %56 = vperm.xlu0 %55, %v42
    %v57 = vpop.permute.xlu0 %56
    %60 = vset.pattern.permute.xlu0 0
    %61 = vperm.xlu0 %60, %v43
    %v62 = vpop.permute.xlu0 %61
    %65 = vset.pattern.permute.xlu0 0
    %66 = vperm.xlu0 %65, %v44
    %v67 = vpop.permute.xlu0 %66
    %70 = vset.pattern.permute.xlu0 0
    %71 = vperm.xlu0 %70, %v45
    %v72 = vpop.permute.xlu0 %71
    %75 = vset.pattern.permute.xlu0 0
    %76 = vperm.xlu0 %75, %v46
    %v77 = vpop.permute.xlu0 %76
    %80 = vset.pattern.permute.xlu0 0
    %81 = vperm.xlu0 %80, %v47
    %v82 = vpop.permute.xlu0 %81
    %85 = vset.pattern.permute.xlu0 0
    %86 = vperm.xlu0 %85, %v48
    %v87 = vpop.permute.xlu0 %86
    %v97 = vunpack.c.l.b16 %v33
    %v98 = vunpack.c.l.b16 %v34
    %v99 = vunpack.c.l.b16 %v35
    %v100 = vunpack.c.l.b16 %v36
    %v101 = vunpack.c.l.b16 %v37
    %v102 = vunpack.c.l.b16 %v38
    %v103 = vunpack.c.l.b16 %v39
    %v104 = vunpack.c.l.b16 %v40
    %v105 = vpack.c.b16 %v98, %v97
    %v106 = vpack.c.b16 %v100, %v99
    %v107 = vpack.c.b16 %v102, %v101
    %v108 = vpack.c.b16 %v104, %v103
    %v113 = vunpack.c.l.b16 %v29
    %v114 = vunpack.c.l.b16 %v30
    %v115 = vunpack.c.l.b16 %v31
    %v116 = vunpack.c.l.b16 %v32
    %v117 = vpack.c.b16 %v114, %v113
    %v118 = vpack.c.b16 %v116, %v115
    %vm121 = vcmask 261120
    %v123 = vsel %vm121, %v105, 0
    %v126 = vsel %vm121, %v106, 0
    %v129 = vsel %vm121, %v107, 0
    %v132 = vsel %vm121, %v108, 0
    %134 = vmatprep.subr.bf16.mxu0 0
    %135 = vmatpush1.bf16.msra.mxu0 %v117
    %136 = vmatprep.subr.bf16.mxu0 0
    %137 = vmatpush1.bf16.msra.mxu0 %v118
    %138 = vmatprep.subr.bf16.mxu0 0
    %139 = vmatpush1.bf16.msra.mxu0 0
    %140 = vmatprep.subr.bf16.mxu0 0
    %141 = vmatpush1.bf16.msra.mxu0 0
    %142 = vmatprep.subr.bf16.mxu0 0
    %143 = vmatpush1.bf16.msra.mxu0 0
    %144 = vmatprep.subr.bf16.mxu0 0
    %145 = vmatpush1.bf16.msra.mxu0 0
    %146 = vmatprep.subr.bf16.mxu0 0
    %147 = vmatpush1.bf16.msra.mxu0 0
    %148 = vmatprep.subr.bf16.mxu0 0
    %149 = vmatpush1.bf16.msra.mxu0 0
    %150 = vmatprep.subr.bf16.mxu0 0
    %151 = vmatpush1.bf16.msra.mxu0 0
    %152 = vmatprep.subr.bf16.mxu0 0
    %153 = vmatpush1.bf16.msra.mxu0 0
    %154 = vmatprep.subr.bf16.mxu0 0
    %155 = vmatpush1.bf16.msra.mxu0 0
    %156 = vmatprep.subr.bf16.mxu0 0
    %157 = vmatpush1.bf16.msra.mxu0 0
    %158 = vmatprep.subr.bf16.mxu0 0
    %159 = vmatpush1.bf16.msra.mxu0 0
    %160 = vmatprep.subr.bf16.mxu0 0
    %161 = vmatpush1.bf16.msra.mxu0 0
    %162 = vmatprep.subr.bf16.mxu0 0
    %163 = vmatpush1.bf16.msra.mxu0 0
    %164 = vmatprep.subr.bf16.mxu0 0
    %165 = vmatpush1.bf16.msra.mxu0 0
    %166 = vmatprep.mubr.bf16.mxu0 0
    %167 = vmatmul.mubr.bf16.gmra.mrb[0].mxu0 %v123
    %v168 = vpop.f32.mrb[0].mxu0
    %v169 = vadd.f32 %v52, %v168
    %v170 = vpop.f32.mrb[0].mxu0
    %v171 = vpop.f32.mrb[0].mxu0
    %v172 = vadd.f32 %v57, %v171
    %v173 = vpop.f32.mrb[0].mxu0
    %174 = vmatprep.mubr.bf16.mxu0 0
    %175 = vmatmul.mubr.bf16.gmra.mrb[0].mxu0 %v126
    %v176 = vpop.f32.mrb[0].mxu0
    %v177 = vadd.f32 %v62, %v176
    %v178 = vpop.f32.mrb[0].mxu0
    %v179 = vpop.f32.mrb[0].mxu0
    %v180 = vadd.f32 %v67, %v179
    %v181 = vpop.f32.mrb[0].mxu0
    %182 = vmatprep.mubr.bf16.mxu0 0
    %183 = vmatmul.mubr.bf16.gmra.mrb[0].mxu0 %v129
    %v184 = vpop.f32.mrb[0].mxu0
    %v185 = vadd.f32 %v72, %v184
    %v186 = vpop.f32.mrb[0].mxu0
    %v187 = vpop.f32.mrb[0].mxu0
    %v188 = vadd.f32 %v77, %v187
    %v189 = vpop.f32.mrb[0].mxu0
    %190 = vmatprep.mubr.bf16.mxu0 0
    %191 = vmatmul.mubr.bf16.gmra.mrb[0].mxu0 %v132
    %v192 = vpop.f32.mrb[0].mxu0
    %v193 = vadd.f32 %v82, %v192
    %v194 = vpop.f32.mrb[0].mxu0
    %v195 = vpop.f32.mrb[0].mxu0
    %v196 = vadd.f32 %v87, %v195
    %v197 = vpop.f32.mrb[0].mxu0
    %198 = vdwg.mxu0
    %vm199 = vcmp.gt.f32.partialorder %v169, 0.0
    %vm200 = vcmp.gt.f32.partialorder %v172, 0.0
    %vm201 = vcmp.gt.f32.partialorder %v177, 0.0
    %vm202 = vcmp.gt.f32.partialorder %v180, 0.0
    %vm203 = vcmp.gt.f32.partialorder %v185, 0.0
    %vm204 = vcmp.gt.f32.partialorder %v188, 0.0
    %vm205 = vcmp.gt.f32.partialorder %v193, 0.0
    %vm206 = vcmp.gt.f32.partialorder %v196, 0.0
    %v207 = vmul.f32 %v169, 0.2
    %v208 = vmul.f32 %v172, 0.2
    %v209 = vmul.f32 %v177, 0.2
    %v210 = vmul.f32 %v180, 0.2
    %v211 = vmul.f32 %v185, 0.2
    %v212 = vmul.f32 %v188, 0.2
    %v213 = vmul.f32 %v193, 0.2
    %v214 = vmul.f32 %v196, 0.2
    %v215 = vsel %vm199, %v169, %v207
    %v216 = vsel %vm200, %v172, %v208
    %v217 = vsel %vm201, %v177, %v209
    %v218 = vsel %vm202, %v180, %v210
    %v219 = vsel %vm203, %v185, %v211
    %v220 = vsel %vm204, %v188, %v212
    %v221 = vsel %vm205, %v193, %v213
    %v222 = vsel %vm206, %v196, %v214
    %v223 = vld [vmem:[%s3] sm:$0xf]
    %v224 = vld [vmem:[%s3 + $0x4] sm:$0xf]
    %v225 = vld [vmem:[%s3 + $0x8] sm:$0xf]
    %v226 = vld [vmem:[%s3 + $0xc] sm:$0xf]
    %v227 = vpack.c.bf16 %v216, %v215
    %v228 = vpack.c.bf16 %v218, %v217
    %v229 = vpack.c.bf16 %v220, %v219
    %v230 = vpack.c.bf16 %v222, %v221
    %v231 = vld [vmem:[%s4] sm:$0xff]
    %v232 = vld [vmem:[%s4 + $0x8] sm:$0xff]
    %v233 = vld [vmem:[%s4 + $0x10] sm:$0xff]
    %v234 = vld [vmem:[%s4 + $0x18] sm:$0xff]
    %236 = vset.pattern.permute.xlu0 0
    %237 = vperm.xlu0 %236, %v231
    %v238 = vpop.permute.xlu0 %237
    %241 = vset.pattern.permute.xlu0 0
    %242 = vperm.xlu0 %241, %v232
    %v243 = vpop.permute.xlu0 %242
    %246 = vset.pattern.permute.xlu0 0
    %247 = vperm.xlu0 %246, %v233
    %v248 = vpop.permute.xlu0 %247
    %251 = vset.pattern.permute.xlu0 0
    %252 = vperm.xlu0 %251, %v234
    %v253 = vpop.permute.xlu0 %252
    %v259 = vunpack.c.l.b16 %v223
    %v260 = vunpack.c.l.b16 %v224
    %v261 = vunpack.c.l.b16 %v225
    %v262 = vunpack.c.l.b16 %v226
    %v263 = vpack.c.b16 %v260, %v259
    %v264 = vpack.c.b16 %v262, %v261
    %vm265 = vcmask 523264
    %v267 = vsel %vm265, %v263, 0
    %v270 = vsel %vm265, %v264, 0
    %272 = vmatprep.subr.bf16.mxu0 0
    %273 = vmatpush1.bf16.msra.mxu0 %v227
    %274 = vmatprep.subr.bf16.mxu0 0
    %275 = vmatpush1.bf16.msra.mxu0 %v228
    %276 = vmatprep.subr.bf16.mxu0 0
    %277 = vmatpush1.bf16.msra.mxu0 %v229
    %278 = vmatprep.subr.bf16.mxu0 0
    %279 = vmatpush1.bf16.msra.mxu0 %v230
    %280 = vmatprep.subr.bf16.mxu0 0
    %281 = vmatpush1.bf16.msra.mxu0 0
    %282 = vmatprep.subr.bf16.mxu0 0
    %283 = vmatpush1.bf16.msra.mxu0 0
    %284 = vmatprep.subr.bf16.mxu0 0
    %285 = vmatpush1.bf16.msra.mxu0 0
    %286 = vmatprep.subr.bf16.mxu0 0
    %287 = vmatpush1.bf16.msra.mxu0 0
    %288 = vmatprep.subr.bf16.mxu0 0
    %289 = vmatpush1.bf16.msra.mxu0 0
    %290 = vmatprep.subr.bf16.mxu0 0
    %291 = vmatpush1.bf16.msra.mxu0 0
    %292 = vmatprep.subr.bf16.mxu0 0
    %293 = vmatpush1.bf16.msra.mxu0 0
    %294 = vmatprep.subr.bf16.mxu0 0
    %295 = vmatpush1.bf16.msra.mxu0 0
    %296 = vmatprep.subr.bf16.mxu0 0
    %297 = vmatpush1.bf16.msra.mxu0 0
    %298 = vmatprep.subr.bf16.mxu0 0
    %299 = vmatpush1.bf16.msra.mxu0 0
    %300 = vmatprep.subr.bf16.mxu0 0
    %301 = vmatpush1.bf16.msra.mxu0 0
    %302 = vmatprep.subr.bf16.mxu0 0
    %303 = vmatpush1.bf16.msra.mxu0 0
    %304 = vmatprep.mubr.bf16.mxu0 0
    %305 = vmatmul.mubr.bf16.gmra.mrb[0].mxu0 %v267
    %v306 = vpop.f32.mrb[0].mxu0
    %v307 = vadd.f32 %v238, %v306
    %v308 = vpop.f32.mrb[0].mxu0
    %v309 = vpop.f32.mrb[0].mxu0
    %v310 = vadd.f32 %v243, %v309
    %v311 = vpop.f32.mrb[0].mxu0
    %312 = vmatprep.mubr.bf16.mxu0 0
    %313 = vmatmul.mubr.bf16.gmra.mrb[0].mxu0 %v270
    %v314 = vpop.f32.mrb[0].mxu0
    %v315 = vadd.f32 %v248, %v314
    %v316 = vpop.f32.mrb[0].mxu0
    %v317 = vpop.f32.mrb[0].mxu0
    %v318 = vadd.f32 %v253, %v317
    %v319 = vpop.f32.mrb[0].mxu0
    %320 = vdwg.mxu0
    %vm321 = vcmp.gt.f32.partialorder %v307, 0.0
    %vm322 = vcmp.gt.f32.partialorder %v310, 0.0
    %vm323 = vcmp.gt.f32.partialorder %v315, 0.0
    %vm324 = vcmp.gt.f32.partialorder %v318, 0.0
    %v325 = vmul.f32 %v307, 0.2
    %v326 = vmul.f32 %v310, 0.2
    %v327 = vmul.f32 %v315, 0.2
    %v328 = vmul.f32 %v318, 0.2
    %v329 = vsel %vm321, %v307, %v325
    %v330 = vsel %vm322, %v310, %v326
    %v331 = vsel %vm323, %v315, %v327
    %v332 = vsel %vm324, %v318, %v328
    %v333 = vld [vmem:[%s5] sm:$0xff]
    %v334 = vld [vmem:[%s5 + $0x8] sm:$0xff]
    %v335 = vld [vmem:[%s5 + $0x10] sm:$0xff]
    %v336 = vld [vmem:[%s5 + $0x18] sm:$0xff]
    %338 = vset.pattern.permute.xlu0 0
    %339 = vperm.xlu0 %338, %v333
    %v340 = vpop.permute.xlu0 %339
    %343 = vset.pattern.permute.xlu0 0
    %344 = vperm.xlu0 %343, %v334
    %v345 = vpop.permute.xlu0 %344
    %348 = vset.pattern.permute.xlu0 0
    %349 = vperm.xlu0 %348, %v335
    %v350 = vpop.permute.xlu0 %349
    %353 = vset.pattern.permute.xlu0 0
    %354 = vperm.xlu0 %353, %v336
    %v355 = vpop.permute.xlu0 %354
    %v357 = vmul.f32 %v329, %v340
    %v358 = vmul.f32 %v330, %v345
    %v359 = vmul.f32 %v331, %v350
    %v360 = vmul.f32 %v332, %v355
    %v361 = vadd.f32 %v357, %v358
    %v362 = vadd.f32 %v361, %v359
    %v363 = vadd.f32 %v362, %v360
    %v364 = vrot.slane %v363, 4
    %v365 = vadd.f32 %v363, %v364
    %v366 = vrot.slane %v365, 2
    %v367 = vadd.f32 %v365, %v366
    %v368 = vrot.slane %v367, 1
    %v369 = vadd.f32 %v367, %v368
    %s370 = sld [smem:[#allocation2]]
    %v371 = vstv %s370
    %v372 = vadd.f32 %v369, %v371
    %v373 = vxor.u32 %v372, 2147483648
    %v374 = vmul.f32 %v373, 1.442695
    %v375 = vpow.pop %v374
    %v376 = vadd.f32 %v375, 1.0
    %v377 = vrcp.pop %v376
    %v378 = vmul.f32 1.0, %v377
    %379 = vst [vmem:[#allocation3] sm:$0x1] %v378
    // Predicated region
    $region30: #{tpu_custom_call.1} parent=1 // pred_check
      _
    $region31: #{tpu_custom_call.1} parent=1 // pred_check_branch
      %381 = sbr.rel (0) target = $region33
    $region32: #{tpu_custom_call.1} parent=1 // pred_region
      %s383 = ssub.s32 16, 16
      %384 = vsyncadd [#allocation4], %s383
      %s386 = sshll.u32 [#allocation3], 4
      %s387 = int_to_ptr.vmem [resolvable:$true] %s386
      %389 = dma.vmem_to_hbm [thread:$0]  %s387, 16, %s7, [#allocation4]
    $region33: #{tpu_custom_call.1} parent=1 // pred_fallthru
      _
    // Predicated region
    $region34: #{tpu_custom_call.1} parent=1 // pred_check
      _
    $region35: #{tpu_custom_call.1} parent=1 // pred_check_branch
      %391 = sbr.rel (0) target = $region37
    $region36: #{tpu_custom_call.1} parent=1 // pred_region
      %392 = dma.done [#allocation4], 16
    $region37: #{tpu_custom_call.1} parent=1 // pred_fallthru
      _
    %393 = vsyncpa [#allocation4], 1

</llo_original>
